<compile_context>
chip_gen: v6e
topology: v6e:2x2x1
jax: 0.10.0
libtpu: 0.0.40
codegen_flags: <defaults>
</compile_context>

<pallas_src>
import functools

import jax
import jax.numpy as jnp
from jax import lax
from jax.experimental import pallas as pl
from jax.experimental.pallas import tpu as pltpu

BN_EPS = 1e-5
_VMEM_CAP = 48 << 20          # stay well under v7x's 64 MiB physical VMEM
_FUSED_BUDGET = 32 << 20      # conv intermediate must fit comfortably


def _round_up(x, m):
    return (x + m - 1) // m * m


# --------------------------- fused single-pass kernel ------------------------
def _fused_conv_bn_relu_kernel(x_ref, w_ref, g_ref, b_ref, o_ref, sum_sc, *,
                               tm, m_true, m_pad, n_tiles):
    # x_ref:   [tm, Kp]    bf16 im2col patch tile
    # w_ref:   [Kp, Cp]    bf16 weights (constant block -> fetched once)
    # g_ref:   [1, Cp]     f32 gamma (padded)
    # b_ref:   [1, Cp]     f32 beta  (padded)
    # o_ref:   [M_pad, Cp] f32 VMEM-resident output (constant block index)
    # sum_sc:  [1, Cp]     f32 running per-channel sum
    i = pl.program_id(0)

    @pl.when(i == 0)
    def _():
        sum_sc[...] = jnp.zeros_like(sum_sc)

    conv = jnp.dot(x_ref[...], w_ref[...], preferred_element_type=jnp.float32)
    row = pl.multiple_of(i * tm, tm)
    o_ref[pl.ds(row, tm), :] = conv
    sum_sc[...] += jnp.sum(conv, axis=0, keepdims=True)

    @pl.when(i == n_tiles - 1)
    def _():
        inv_m = jnp.float32(1.0 / m_true)
        mean = sum_sc[...] * inv_m                         # [1, Cp]

        # Centered variance sweep over the VMEM-resident conv output: avoids
        # the E[x^2]-E[x]^2 cancellation and costs only VMEM bandwidth.
        def m2_body(t, acc):
            r = pl.multiple_of(t * tm, tm)
            d = o_ref[pl.ds(r, tm), :] - mean
            return acc + jnp.sum(d * d, axis=0, keepdims=True)

        m2 = lax.fori_loop(0, n_tiles, m2_body, jnp.zeros_like(mean))
        # zero-padded rows each contributed mean^2 to the centered sum; remove.
        m2 = m2 - jnp.float32(m_pad - m_true) * mean * mean
        inv_std = lax.rsqrt(jnp.maximum(m2 * inv_m, 0.0) + BN_EPS)
        scale = g_ref[...] * inv_std
        shift = b_ref[...] - mean * scale

        # In-place normalize + affine + ReLU sweep (pure VMEM traffic).
        def norm_body(t, carry):
            r = pl.multiple_of(t * tm, tm)
            c = o_ref[pl.ds(r, tm), :]
            o_ref[pl.ds(r, tm), :] = jnp.maximum(c * scale + shift, 0.0)
            return carry

        lax.fori_loop(0, n_tiles, norm_body, 0)


# --------------------------- two-pass fallback kernels -----------------------
def _conv_stats_kernel(x_ref, w_ref, conv_ref, stats_ref):
    # conv_ref: [tm, Cp] bf16 (halves the dominant HBM stream); stats are taken
    # from the f32 MXU accumulator in vregs before the cast.
    conv = jnp.dot(x_ref[...], w_ref[...], preferred_element_type=jnp.float32)
    conv_ref[...] = conv.astype(conv_ref.dtype)
    s = jnp.sum(conv, axis=0, keepdims=True)
    ss = jnp.sum(conv * conv, axis=0, keepdims=True)
    stats_ref[...] = jnp.concatenate([s, ss], axis=0)[None]   # one full store


def _bn_relu_kernel(conv_ref, scale_ref, shift_ref, o_ref):
    c = conv_ref[...].astype(jnp.float32)
    o_ref[...] = jnp.maximum(c * scale_ref[...] + shift_ref[...],
                             0.0).astype(o_ref.dtype)


# ------------------------------------ wrapper --------------------------------
@functools.partial(
    jax.jit,
    static_argnames=("stride", "padding", "dilation", "block_m",
                     "force_two_pass"))
def conv2d_batchnorm_relu(x_nchw, weight, bias, gamma, beta, *,
                          stride=1, padding=1, dilation=1, block_m=512,
                          force_two_pass=False):
    """Forward pass equivalent to conv2DBatchNormRelu (is_batchnorm=True, train).

    x_nchw : [N, Cin, H, W]   (PyTorch convention)
    weight : [Cout, Cin, kh, kw]
    bias   : [Cout]  (cancelled exactly by training-mode BN -> unused)
    gamma  : [Cout]
    beta   : [Cout]
    returns: [N, Cout, Ho, Wo]
    """
    del bias  # exactly cancelled by BN mean subtraction (dead work otherwise)

    N, Cin, H, W = x_nchw.shape
    Cout, Cin_w, kh, kw = weight.shape
    assert Cin == Cin_w

    Ho = (H + 2 * padding - dilation * (kh - 1) - 1) // stride + 1
    Wo = (W + 2 * padding - dilation * (kw - 1) - 1) // stride + 1

    M = N * Ho * Wo
    K = kh * kw * Cin
    Cp = _round_up(Cout, 128)          # lane-dense output channels
    Kp = _round_up(K, 128)             # clean MXU / (16,128) bf16 tiles

    # M tile: 128-aligned (v5e MXU cadence); keep >= 4 grid steps when there is
    # enough work (DMA/compute pipelining, even split across v7x's two TCs).
    tm = min(_round_up(block_m, 128), _round_up(M, 128))
    while tm > 128 and _round_up(M, tm) // tm < 4:
        tm //= 2
    M_pad = _round_up(M, tm)
    n_tiles = M_pad // tm

    # ---- XLA glue: NCHW -> NHWC, im2col patches in bf16 ----------------------
    # TODO(synk): fuse im2col into the kernel (halo'd row-slab DMA of the padded
    # NHWC input with memory_space=pl.ANY) to remove the kh*kw patch blow-up in
    # HBM entirely.
    x = jnp.transpose(x_nchw, (0, 2, 3, 1)).astype(jnp.bfloat16)  # [N,H,W,Cin]
    xp = jnp.pad(x, ((0, 0), (padding, padding), (padding, padding), (0, 0)))
    patch_list = []
    for i in range(kh):
        for j in range(kw):
            r0, c0 = i * dilation, j * dilation
            patch_list.append(
                xp[:, r0:r0 + (Ho - 1) * stride + 1:stride,
                      c0:c0 + (Wo - 1) * stride + 1:stride, :])
    # feature ordering (kh, kw, Cin), matching the weight reshape below
    patches = jnp.concatenate(patch_list, axis=-1).reshape(M, K)
    # zero-padded rows contribute nothing to the stats (bias dropped);
    # zero K columns contribute nothing to the matmul.
    patches = jnp.pad(patches, ((0, M_pad - M), (0, Kp - K)))

    # weight [Cout,Cin,kh,kw] -> [kh,kw,Cin,Cout] -> [K,Cout] -> pad to [Kp,Cp]
    w_mat = jnp.transpose(weight, (2, 3, 1, 0)).reshape(K, Cout)
    w_mat = jnp.pad(w_mat, ((0, Kp - K), (0, Cp - Cout))).astype(jnp.bfloat16)
    gamma_p = jnp.pad(gamma.astype(jnp.float32), (0, Cp - Cout)).reshape(1, Cp)
    beta_p = jnp.pad(beta.astype(jnp.float32), (0, Cp - Cout)).reshape(1, Cp)

    fused_bytes = (2 * M_pad * Cp * 4       # VMEM-resident conv/output block
                   + 2 * tm * Kp * 2        # double-buffered patch tiles
                   + 2 * Kp * Cp * 2        # weight block (constant index)
                   + 64 * Cp * 4)           # gamma/beta/stats slack
    use_fused = (not force_two_pass) and fused_bytes <= _FUSED_BUDGET

    if use_fused:
        # ---- single fused pass: conv + batch stats + BN + ReLU --------------
        vmem_limit = int(min(max(3 * fused_bytes // 2, 16 << 20), _VMEM_CAP))
        kernel = functools.partial(_fused_conv_bn_relu_kernel,
                                   tm=tm, m_true=M, m_pad=M_pad,
                                   n_tiles=n_tiles)
        out2d = pl.pallas_call(
            kernel,
            out_shape=jax.ShapeDtypeStruct((M_pad, Cp), jnp.float32),
            grid_spec=pltpu.PrefetchScalarGridSpec(
                num_scalar_prefetch=0,
                grid=(n_tiles,),
                in_specs=[
                    pl.BlockSpec((tm, Kp), lambda i: (i, 0)),
                    # constant block index -> fetched once by the pipeline.
                    # TODO(synk): single-buffer it (pipeline_mode=pl.Buffered(1))
                    # to reclaim the second weight buffer on v7x.
                    pl.BlockSpec((Kp, Cp), lambda i: (0, 0)),
                    pl.BlockSpec((1, Cp), lambda i: (0, 0)),
                    pl.BlockSpec((1, Cp), lambda i: (0, 0)),
                ],
                out_specs=pl.BlockSpec((M_pad, Cp), lambda i: (0, 0)),
                scratch_shapes=[pltpu.VMEM((1, Cp), jnp.float32)]),
            compiler_params=pltpu.CompilerParams(
                dimension_semantics=("arbitrary",),   # stats carried across tiles
                vmem_limit_bytes=vmem_limit),
        )(patches, w_mat, gamma_p, beta_p)
    else:
        # ---- pass 1: conv + per-tile (sum, sum_sq), bf16 intermediate --------
        vmem1 = 2 * (tm * Kp * 2 + Kp * Cp * 2 + tm * Cp * 2 + 2 * Cp * 4)
        vmem1 = int(min(max(3 * vmem1 // 2, 16 << 20), _VMEM_CAP))
        conv_out, stats = pl.pallas_call(
            _conv_stats_kernel,
            out_shape=(jax.ShapeDtypeStruct((M_pad, Cp), jnp.bfloat16),
                       jax.ShapeDtypeStruct((n_tiles, 2, Cp), jnp.float32)),
            grid_spec=pltpu.PrefetchScalarGridSpec(
                num_scalar_prefetch=0,
                grid=(n_tiles,),
                in_specs=[
                    pl.BlockSpec((tm, Kp), lambda i: (i, 0)),
                    pl.BlockSpec((Kp, Cp), lambda i: (0, 0)),
                ],
                out_specs=(
                    pl.BlockSpec((tm, Cp), lambda i: (i, 0)),
                    pl.BlockSpec((1, 2, Cp), lambda i: (i, 0, 0)),
                )),
            compiler_params=pltpu.CompilerParams(
                dimension_semantics=("parallel",),
                vmem_limit_bytes=vmem1),
        )(patches, w_mat)

        # tiny glue: combine partial stats, fold BN affine into scale/shift.
        # TODO(synk): combine per-tile (mean, M2) Welford-style to avoid the
        # one-pass-variance cancellation when |mean| >> std.
        sum_c = jnp.sum(stats[:, 0, :], axis=0)         # [Cp]
        sumsq_c = jnp.sum(stats[:, 1, :], axis=0)       # [Cp]
        mean = sum_c / M                                 # padded rows are zero
        var = jnp.maximum(sumsq_c / M - mean * mean, 0.0)
        inv_std = lax.rsqrt(var + BN_EPS)
        scale = (gamma_p[0] * inv_std).reshape(1, Cp)
        shift = (beta_p[0] - mean * gamma_p[0] * inv_std).reshape(1, Cp)

        # ---- pass 2: mem-bound normalize + affine + ReLU with wide tiles -----
        tm2 = tm
        for mult in (16, 8, 4, 2):
            if n_tiles % mult == 0 and tm * mult <= 2048:
                tm2 = tm * mult
                break
        n_tiles2 = M_pad // tm2
        vmem2 = 2 * (tm2 * Cp * 2 + tm2 * Cp * 4 + 2 * Cp * 4)
        vmem2 = int(min(max(3 * vmem2 // 2, 16 << 20), _VMEM_CAP))
        out2d = pl.pallas_call(
            _bn_relu_kernel,
            out_shape=jax.ShapeDtypeStruct((M_pad, Cp), jnp.float32),
            grid_spec=pltpu.PrefetchScalarGridSpec(
                num_scalar_prefetch=0,
                grid=(n_tiles2,),
                in_specs=[
                    pl.BlockSpec((tm2, Cp), lambda i: (i, 0)),
                    pl.BlockSpec((1, Cp), lambda i: (0, 0)),
                    pl.BlockSpec((1, Cp), lambda i: (0, 0)),
                ],
                out_specs=pl.BlockSpec((tm2, Cp), lambda i: (i, 0))),
            compiler_params=pltpu.CompilerParams(
                dimension_semantics=("parallel",),
                vmem_limit_bytes=vmem2),
        )(conv_out, scale, shift)

    # TODO(synk): return NHWC (or the padded [M_pad, Cp] slab) when the caller
    # accepts it; the NCHW transpose below costs an extra lane-sparse HBM pass.
    out = out2d[:M, :Cout].reshape(N, Ho, Wo, Cout)
    return jnp.transpose(out, (0, 3, 1, 2))


def _reference(x_nchw, weight, bias, gamma, beta, *, stride=1, padding=1,
               dilation=1):
    """Pure-JAX f32 reference (same semantics) for a sanity check."""
    conv = lax.conv_general_dilated(
        x_nchw.astype(jnp.float32), weight.astype(jnp.float32),
        window_strides=(stride, stride),
        padding=((padding, padding), (padding, padding)),
        rhs_dilation=(dilation, dilation),
        dimension_numbers=("NCHW", "OIHW", "NCHW"))
    conv = conv + bias.reshape(1, -1, 1, 1)
    mean = jnp.mean(conv, axis=(0, 2, 3), keepdims=True)
    var = jnp.mean((conv - mean) ** 2, axis=(0, 2, 3), keepdims=True)
    y = (conv - mean) * lax.rsqrt(var + BN_EPS)
    y = y * gamma.reshape(1, -1, 1, 1) + beta.reshape(1, -1, 1, 1)
    return jnp.maximum(y, 0.0)


if __name__ == "__main__":
    # Module config: in_channels=4, n_filters=8, k_size=3, stride=1, padding=1
    N, Cin, H, W = 2, 4, 16, 16
    Cout, kh, kw = 8, 3, 3
    stride, padding = 1, 1

    key = jax.random.PRNGKey(0)
    k_x, k_w, k_b, k_g, k_be = jax.random.split(key, 5)

    x = jax.random.normal(k_x, (N, Cin, H, W), dtype=jnp.float32)
    weight = jax.random.normal(k_w, (Cout, Cin, kh, kw), dtype=jnp.float32) * 0.1
    bias = jax.random.normal(k_b, (Cout,), dtype=jnp.float32) * 0.1
    gamma = 1.0 + 0.1 * jax.random.normal(k_g, (Cout,), dtype=jnp.float32)
    beta = 0.1 * jax.random.normal(k_be, (Cout,), dtype=jnp.float32)

    ref = jax.block_until_ready(
        _reference(x, weight, bias, gamma, beta, stride=stride, padding=padding))

    # fused single-kernel path (conv intermediate VMEM-resident)
    out = jax.block_until_ready(
        conv2d_batchnorm_relu(x, weight, bias, gamma, beta,
                              stride=stride, padding=padding))
    assert out.shape == (N, Cout, H, W), out.shape
    # bf16 MXU inputs (f32 accumulation / BN math) -> a few e-3 abs error budget
    assert jnp.allclose(out, ref, rtol=3e-2, atol=3e-2), float(
        jnp.max(jnp.abs(out - ref)))

    # also exercise the large-activation two-pass fallback on the same input
    out2 = jax.block_until_ready(
        conv2d_batchnorm_relu(x, weight, bias, gamma, beta,
                              stride=stride, padding=padding,
                              force_two_pass=True))
    assert jnp.allclose(out2, ref, rtol=3e-2, atol=3e-2), float(
        jnp.max(jnp.abs(out2 - ref)))

    print("KERNEL_OK")
</pallas_src>

<mosaic_0001>
module attributes {stable_mosaic.version = 11 : i64} {
  func.func @_fused_conv_bn_relu_kernel(%arg0: i32, %arg1: memref<128x128xbf16, #tpu.memory_space<vmem>>, %arg2: memref<128x128xbf16, #tpu.memory_space<vmem>>, %arg3: memref<1x128xf32, #tpu.memory_space<vmem>>, %arg4: memref<1x128xf32, #tpu.memory_space<vmem>>, %arg5: memref<512x128xf32, #tpu.memory_space<vmem>>, %arg6: memref<1x128xf32, #tpu.memory_space<vmem>>) attributes {dimension_semantics = [#tpu.dimension_semantics<arbitrary>], iteration_bounds = array<i64: 4>, scalar_prefetch = 0 : i64, scratch_operands = 1 : i64, tpu.core_type = #tpu.core_type<tc>, window_params = [{transform_indices = @transform_0, window_bounds = array<i64: 128, 128>}, {pipeline_mode = #tpu.pipeline_mode<synchronous>, transform_indices = @transform_1, window_bounds = array<i64: 128, 128>}, {pipeline_mode = #tpu.pipeline_mode<synchronous>, transform_indices = @transform_2, window_bounds = array<i64: 1, 128>}, {pipeline_mode = #tpu.pipeline_mode<synchronous>, transform_indices = @transform_3, window_bounds = array<i64: 1, 128>}, {pipeline_mode = #tpu.pipeline_mode<synchronous>, transform_indices = @transform_4, window_bounds = array<i64: 512, 128>}]} {
    %c0_i32 = arith.constant 0 : i32
    %0 = arith.cmpi eq, %arg0, %c0_i32 : i32
    %1 = arith.extui %0 : i1 to i32
    %c0_i32_0 = arith.constant 0 : i32
    %2 = arith.cmpi ne, %1, %c0_i32_0 : i32
    scf.if %2 {
      %cst_11 = arith.constant 0.000000e+00 : f32
      %18 = vector.broadcast %cst_11 : f32 to vector<1x128xf32>
      %c0_12 = arith.constant 0 : index
      %c0_13 = arith.constant 0 : index
      %19 = vector.load %arg6[%c0_12, %c0_13] : memref<1x128xf32, #tpu.memory_space<vmem>>, vector<1x128xf32>
      tpu.vector_store %arg6[%c0_12, %c0_13], %18 {strides = array<i32>} : memref<1x128xf32, #tpu.memory_space<vmem>>, vector<1x128xf32>,
    } else {
    }
    %c0 = arith.constant 0 : index
    %c0_1 = arith.constant 0 : index
    %3 = vector.load %arg1[%c0, %c0_1] : memref<128x128xbf16, #tpu.memory_space<vmem>>, vector<128x128xbf16>
    %c0_2 = arith.constant 0 : index
    %c0_3 = arith.constant 0 : index
    %4 = vector.load %arg2[%c0_2, %c0_3] : memref<128x128xbf16, #tpu.memory_space<vmem>>, vector<128x128xbf16>
    %cst = arith.constant dense<0.000000e+00> : vector<128x128xf32>
    %5 = tpu.matmul %3, %4, %cst {dimension_numbers = #tpu.dot_dimension_numbers<[1], [0], [0], [1], [0, 0, 1, 1], [], []>} : vector<128x128xbf16>, vector<128x128xbf16>, vector<128x128xf32> -> vector<128x128xf32>
    %c128_i32 = arith.constant 128 : i32
    %6 = arith.muli %arg0, %c128_i32 : i32
    %7 = tpu.assume_multiple %6, 128 : i32
    %8 = arith.index_cast %7 : i32 to index
    %c0_4 = arith.constant 0 : index
    %9 = vector.load %arg5[%8, %c0_4] : memref<512x128xf32, #tpu.memory_space<vmem>>, vector<128x128xf32>
    tpu.vector_store %arg5[%8, %c0_4], %5 {strides = array<i32>} : memref<512x128xf32, #tpu.memory_space<vmem>>, vector<128x128xf32>,
    %c0_5 = arith.constant 0 : index
    %c0_6 = arith.constant 0 : index
    %10 = vector.load %arg6[%c0_5, %c0_6] : memref<1x128xf32, #tpu.memory_space<vmem>>, vector<1x128xf32>
    %cst_7 = arith.constant dense<0.000000e+00> : vector<128xf32>
    %11 = vector.multi_reduction <add>, %5, %cst_7 [0] : vector<128x128xf32> to vector<128xf32>
    %12 = vector.shape_cast %11 : vector<128xf32> to vector<1x128xf32>
    %13 = arith.addf %10, %12 : vector<1x128xf32>
    %c0_8 = arith.constant 0 : index
    %c0_9 = arith.constant 0 : index
    %14 = vector.load %arg6[%c0_8, %c0_9] : memref<1x128xf32, #tpu.memory_space<vmem>>, vector<1x128xf32>
    tpu.vector_store %arg6[%c0_8, %c0_9], %13 {strides = array<i32>} : memref<1x128xf32, #tpu.memory_space<vmem>>, vector<1x128xf32>,
    %c3_i32 = arith.constant 3 : i32
    %15 = arith.cmpi eq, %arg0, %c3_i32 : i32
    %16 = arith.extui %15 : i1 to i32
    %c0_i32_10 = arith.constant 0 : i32
    %17 = arith.cmpi ne, %16, %c0_i32_10 : i32
    scf.if %17 {
      %c0_11 = arith.constant 0 : index
      %c0_12 = arith.constant 0 : index
      %18 = vector.load %arg6[%c0_11, %c0_12] : memref<1x128xf32, #tpu.memory_space<vmem>>, vector<1x128xf32>
      %cst_13 = arith.constant 0.001953125 : f32
      %19 = vector.broadcast %cst_13 : f32 to vector<1x128xf32>
      %20 = arith.mulf %18, %19 : vector<1x128xf32>
      %cst_14 = arith.constant 0.000000e+00 : f32
      %21 = vector.broadcast %cst_14 : f32 to vector<1x128xf32>
      %c0_i32_15 = arith.constant 0 : i32
      %c4_i32 = arith.constant 4 : i32
      %22 = arith.addi %c0_i32_15, %c4_i32 : i32
      %c1_i32 = arith.constant 1 : i32
      %23 = scf.for %arg7 = %c0_i32_15 to %22 step %c1_i32 iter_args(%arg8 = %21) -> (vector<1x128xf32>)  : i32 {
        %c128_i32_29 = arith.constant 128 : i32
        %41 = arith.muli %arg7, %c128_i32_29 : i32
        %42 = tpu.assume_multiple %41, 128 : i32
        %43 = arith.index_cast %42 : i32 to index
        %c0_30 = arith.constant 0 : index
        %44 = vector.load %arg5[%43, %c0_30] : memref<512x128xf32, #tpu.memory_space<vmem>>, vector<128x128xf32>
        %45 = vector.broadcast %20 : vector<1x128xf32> to vector<128x128xf32>
        %46 = arith.subf %44, %45 : vector<128x128xf32>
        %47 = arith.mulf %46, %46 : vector<128x128xf32>
        %cst_31 = arith.constant dense<0.000000e+00> : vector<128xf32>
        %48 = vector.multi_reduction <add>, %47, %cst_31 [0] : vector<128x128xf32> to vector<128xf32>
        %49 = vector.shape_cast %48 : vector<128xf32> to vector<1x128xf32>
        %50 = arith.addf %arg8, %49 : vector<1x128xf32>
        scf.yield %50 : vector<1x128xf32>
      }
      %c4_i32_16 = arith.constant 4 : i32
      %cst_17 = arith.constant 0.000000e+00 : f32
      %24 = vector.broadcast %cst_17 : f32 to vector<1x128xf32>
      %25 = arith.mulf %24, %20 : vector<1x128xf32>
      %26 = arith.mulf %25, %20 : vector<1x128xf32>
      %27 = arith.subf %23, %26 : vector<1x128xf32>
      %cst_18 = arith.constant 0.001953125 : f32
      %28 = vector.broadcast %cst_18 : f32 to vector<1x128xf32>
      %29 = arith.mulf %27, %28 : vector<1x128xf32>
      %cst_19 = arith.constant 0.000000e+00 : f32
      %30 = vector.broadcast %cst_19 : f32 to vector<1x128xf32>
      %31 = arith.maximumf %29, %30 : vector<1x128xf32>
      %cst_20 = arith.constant 9.99999974E-6 : f32
      %32 = vector.broadcast %cst_20 : f32 to vector<1x128xf32>
      %33 = arith.addf %31, %32 : vector<1x128xf32>
      %34 = math.rsqrt %33 : vector<1x128xf32>
      %c0_21 = arith.constant 0 : index
      %c0_22 = arith.constant 0 : index
      %35 = vector.load %arg3[%c0_21, %c0_22] : memref<1x128xf32, #tpu.memory_space<vmem>>, vector<1x128xf32>
      %36 = arith.mulf %35, %34 : vector<1x128xf32>
      %c0_23 = arith.constant 0 : index
      %c0_24 = arith.constant 0 : index
      %37 = vector.load %arg4[%c0_23, %c0_24] : memref<1x128xf32, #tpu.memory_space<vmem>>, vector<1x128xf32>
      %38 = arith.mulf %20, %36 : vector<1x128xf32>
      %39 = arith.subf %37, %38 : vector<1x128xf32>
      %c0_i32_25 = arith.constant 0 : i32
      %c4_i32_26 = arith.constant 4 : i32
      %40 = arith.addi %c0_i32_25, %c4_i32_26 : i32
      %c1_i32_27 = arith.constant 1 : i32
      scf.for %arg7 = %c0_i32_25 to %40 step %c1_i32_27  : i32 {
        %c128_i32_29 = arith.constant 128 : i32
        %41 = arith.muli %arg7, %c128_i32_29 : i32
        %42 = tpu.assume_multiple %41, 128 : i32
        %43 = arith.index_cast %42 : i32 to index
        %c0_30 = arith.constant 0 : index
        %44 = vector.load %arg5[%43, %c0_30] : memref<512x128xf32, #tpu.memory_space<vmem>>, vector<128x128xf32>
        %45 = vector.broadcast %36 : vector<1x128xf32> to vector<128x128xf32>
        %46 = arith.mulf %44, %45 : vector<128x128xf32>
        %47 = vector.broadcast %39 : vector<1x128xf32> to vector<128x128xf32>
        %48 = arith.addf %46, %47 : vector<128x128xf32>
        %cst_31 = arith.constant 0.000000e+00 : f32
        %49 = vector.broadcast %cst_31 : f32 to vector<128x128xf32>
        %50 = arith.maximumf %48, %49 : vector<128x128xf32>
        %51 = arith.index_cast %42 : i32 to index
        %c0_32 = arith.constant 0 : index
        %52 = vector.load %arg5[%51, %c0_32] : memref<512x128xf32, #tpu.memory_space<vmem>>, vector<128x128xf32>
        tpu.vector_store %arg5[%51, %c0_32], %50 {strides = array<i32>} : memref<512x128xf32, #tpu.memory_space<vmem>>, vector<128x128xf32>,
      }
      %c4_i32_28 = arith.constant 4 : i32
    } else {
    }
    return
  }
  func.func @transform_0(%arg0: i32) -> (i32, i32) {
    %c0_i32 = arith.constant 0 : i32
    %c0_i32_0 = arith.constant 0 : i32
    return %arg0, %c0_i32 : i32, i32
  }
  func.func @transform_1(%arg0: i32) -> (i32, i32) {
    %c0_i32 = arith.constant 0 : i32
    %c0_i32_0 = arith.constant 0 : i32
    %c0_i32_1 = arith.constant 0 : i32
    return %c0_i32, %c0_i32_0 : i32, i32
  }
  func.func @transform_2(%arg0: i32) -> (i32, i32) {
    %c0_i32 = arith.constant 0 : i32
    %c0_i32_0 = arith.constant 0 : i32
    %c0_i32_1 = arith.constant 0 : i32
    return %c0_i32, %c0_i32_0 : i32, i32
  }
  func.func @transform_3(%arg0: i32) -> (i32, i32) {
    %c0_i32 = arith.constant 0 : i32
    %c0_i32_0 = arith.constant 0 : i32
    %c0_i32_1 = arith.constant 0 : i32
    return %c0_i32, %c0_i32_0 : i32, i32
  }
  func.func @transform_4(%arg0: i32) -> (i32, i32) {
    %c0_i32 = arith.constant 0 : i32
    %c0_i32_0 = arith.constant 0 : i32
    %c0_i32_1 = arith.constant 0 : i32
    return %c0_i32, %c0_i32_0 : i32, i32
  }
}

</mosaic_0001>

<llo_original>
// kernel: conv2d_batchnorm_relu.1
$region0: #{conv2d_batchnorm_relu.1}
  #allocation0 [shape = 'u32[]', space=smem, size = 0x4, offset = 0x4, fixed_abs, tag = 'smem constant byte address 0x4 - core index']
  #allocation1 [shape = 'u32[144,128]{1,0:T(1,128)}', space=vmem, size = 0x12000, scoped, tag = 'internal scratch']
  #allocation2 [shape = 'f32[1,128]{1,0:T(1,128)}', space=vmem, size = 0x200, scoped, tag = 'scratch operand']
  %s0 = inlined_call_operand.vmem [shape: bf16[512,128], index: 0, kind: input, shape index: {}]
  %s1 = inlined_call_operand.vmem [shape: bf16[128,128], index: 1, kind: input, shape index: {}]
  %s2 = inlined_call_operand.vmem [shape: f32[1,128], index: 2, kind: input, shape index: {}]
  %s3 = inlined_call_operand.vmem [shape: f32[1,128], index: 3, kind: input, shape index: {}]
  %s4 = inlined_call_operand.vmem [shape: f32[512,128], index: 4, kind: output, shape index: {}]
  %s5 = sld [smem:[#allocation0]]
  $region71: #{conv2d_batchnorm_relu.1} parent=0
    _
  %s7 = ssub.s32 1, %s5
  %s8 = scalar_select 0, %s7, %s5
  loop: start=0, step=1, limit=6
  $region2: #{conv2d_batchnorm_relu.1} parent=0 // loop_pre_header
    _
  $region3: #{conv2d_batchnorm_relu.1} parent=0 // loop_header
    %s10 = sphi 0, %s14
    %p11 = scmp.ge.s32.totalorder %s10, 6
    %s20 = sphi 0, %s22
    %s23 = sphi 0, %s20
    %s24 = sphi 0, %s23
    %s40 = sphi 0, %s24
    %s44 = sphi 0, %s44
    %s46 = sphi 0, %s44
    %s47 = sphi 0, %s46
    %s61 = sphi 0, %s47
    %s65 = sphi 0, %s65
    %s67 = sphi 0, %s65
    %s68 = sphi 0, %s67
    %s82 = sphi 0, %s68
    %s86 = sphi 0, %s86
    %s88 = sphi 0, %s86
    %s89 = sphi 0, %s88
    %s103 = sphi 0, %s89
    %s107 = sphi 0, %s107
    %s109 = sphi 0, %s107
    %s110 = sphi 0, %s109
    %s124 = sphi 0, %s110
  $region4: #{conv2d_batchnorm_relu.1} parent=0 // loop_header_branch
    %13 = sbr.rel (%p11) target = $region8
  $region5: #{conv2d_batchnorm_relu.1} parent=0 // loop_body
    %s15 = ssub.s32 %s10, 1
    %s16 = ssub.s32 %s10, 2
    %s17 = sadd.s32 %s10, 1
    %s18 = ssub.s32 %s10, %s17
    %p19 = scmp.eq.s32.totalorder %s18, 0
    %s21 = sadd.s32 %s20, 1
    %s22 = scalar_select %p19, %s20, %s21
    %p25 = pneg %p19
    %p26 = scmp.eq.s32.totalorder %s10, 3
    %p27 = por %p25, %p26
    %p28 = scmp.ne.s32.totalorder %s20, %s23
    %p29 = scmp.eq.s32.totalorder %s10, 0
    %p30 = por %p28, %p29
    %p31 = scmp.ne.s32.totalorder %s20, %s23
    %p32 = scmp.eq.s32.totalorder %s15, 3
    %p33 = por %p31, %p32
    %p34 = scmp.ne.s32.totalorder %s23, %s24
    %p35 = scmp.eq.s32.totalorder %s15, 0
    %p36 = por %p34, %p35
    %p37 = scmp.ne.s32.totalorder %s23, %s24
    %p38 = scmp.eq.s32.totalorder %s16, 3
    %p39 = por %p37, %p38
    %p41 = scmp.ne.s32.totalorder %s24, %s40
    %p42 = scmp.eq.s32.totalorder %s16, 0
    %p43 = por %p41, %p42
    %s45 = sadd.s32 %s44, 1
    %p48 = scmp.eq.s32.totalorder %s10, 3
    %p49 = scmp.ne.s32.totalorder %s44, %s46
    %p50 = scmp.eq.s32.totalorder %s10, 0
    %p51 = por %p49, %p50
    %p52 = scmp.ne.s32.totalorder %s44, %s46
    %p53 = scmp.eq.s32.totalorder %s15, 3
    %p54 = por %p52, %p53
    %p55 = scmp.ne.s32.totalorder %s46, %s47
    %p56 = scmp.eq.s32.totalorder %s15, 0
    %p57 = por %p55, %p56
    %p58 = scmp.ne.s32.totalorder %s46, %s47
    %p59 = scmp.eq.s32.totalorder %s16, 3
    %p60 = por %p58, %p59
    %p62 = scmp.ne.s32.totalorder %s47, %s61
    %p63 = scmp.eq.s32.totalorder %s16, 0
    %p64 = por %p62, %p63
    %s66 = sadd.s32 %s65, 1
    %p69 = scmp.eq.s32.totalorder %s10, 3
    %p70 = scmp.ne.s32.totalorder %s65, %s67
    %p71 = scmp.eq.s32.totalorder %s10, 0
    %p72 = por %p70, %p71
    %p73 = scmp.ne.s32.totalorder %s65, %s67
    %p74 = scmp.eq.s32.totalorder %s15, 3
    %p75 = por %p73, %p74
    %p76 = scmp.ne.s32.totalorder %s67, %s68
    %p77 = scmp.eq.s32.totalorder %s15, 0
    %p78 = por %p76, %p77
    %p79 = scmp.ne.s32.totalorder %s67, %s68
    %p80 = scmp.eq.s32.totalorder %s16, 3
    %p81 = por %p79, %p80
    %p83 = scmp.ne.s32.totalorder %s68, %s82
    %p84 = scmp.eq.s32.totalorder %s16, 0
    %p85 = por %p83, %p84
    %s87 = sadd.s32 %s86, 1
    %p90 = scmp.eq.s32.totalorder %s10, 3
    %p91 = scmp.ne.s32.totalorder %s86, %s88
    %p92 = scmp.eq.s32.totalorder %s10, 0
    %p93 = por %p91, %p92
    %p94 = scmp.ne.s32.totalorder %s86, %s88
    %p95 = scmp.eq.s32.totalorder %s15, 3
    %p96 = por %p94, %p95
    %p97 = scmp.ne.s32.totalorder %s88, %s89
    %p98 = scmp.eq.s32.totalorder %s15, 0
    %p99 = por %p97, %p98
    %p100 = scmp.ne.s32.totalorder %s88, %s89
    %p101 = scmp.eq.s32.totalorder %s16, 3
    %p102 = por %p100, %p101
    %p104 = scmp.ne.s32.totalorder %s89, %s103
    %p105 = scmp.eq.s32.totalorder %s16, 0
    %p106 = por %p104, %p105
    %s108 = sadd.s32 %s107, 1
    %p111 = scmp.eq.s32.totalorder %s10, 3
    %p112 = scmp.ne.s32.totalorder %s107, %s109
    %p113 = scmp.eq.s32.totalorder %s10, 0
    %p114 = por %p112, %p113
    %p115 = scmp.ne.s32.totalorder %s107, %s109
    %p116 = scmp.eq.s32.totalorder %s15, 3
    %p117 = por %p115, %p116
    %p118 = scmp.ne.s32.totalorder %s109, %s110
    %p119 = scmp.eq.s32.totalorder %s15, 0
    %p120 = por %p118, %p119
    %p121 = scmp.ne.s32.totalorder %s109, %s110
    %p122 = scmp.eq.s32.totalorder %s16, 3
    %p123 = por %p121, %p122
    %p125 = scmp.ne.s32.totalorder %s110, %s124
    %p126 = scmp.eq.s32.totalorder %s16, 0
    %p127 = por %p125, %p126
    %p128 = scmp.le.s32.totalorder 1, %s10
    %p129 = scmp.lt.s32.totalorder %s10, 5
    %p130 = pnand %p128, %p129
    %p131 = pneg %p130
    // Predicated region
    $region9: #{conv2d_batchnorm_relu.1} parent=5 // pred_check
      _
    $region10: #{conv2d_batchnorm_relu.1} parent=5 // pred_check_branch
      %133 = sbr.rel (%p130) target = $region12
    $region11: #{conv2d_batchnorm_relu.1} parent=5 // pred_region
      %s134 = ssub.s32 %s10, 1
      // Predicated region
      $region13: #{conv2d_batchnorm_relu.1} parent=11 // pred_check
        %p135 = pneg %p57
      $region14: #{conv2d_batchnorm_relu.1} parent=11 // pred_check_branch
        %137 = sbr.rel (%p135) target = $region16
      $region15: #{conv2d_batchnorm_relu.1} parent=11 // pred_region
        _
      $region16: #{conv2d_batchnorm_relu.1} parent=11 // pred_fallthru
        _
      // Predicated region
      $region17: #{conv2d_batchnorm_relu.1} parent=11 // pred_check
        %p138 = pneg %p78
      $region18: #{conv2d_batchnorm_relu.1} parent=11 // pred_check_branch
        %140 = sbr.rel (%p138) target = $region20
      $region19: #{conv2d_batchnorm_relu.1} parent=11 // pred_region
        _
      $region20: #{conv2d_batchnorm_relu.1} parent=11 // pred_fallthru
        _
      // Predicated region
      $region21: #{conv2d_batchnorm_relu.1} parent=11 // pred_check
        %p141 = pneg %p99
      $region22: #{conv2d_batchnorm_relu.1} parent=11 // pred_check_branch
        %143 = sbr.rel (%p141) target = $region24
      $region23: #{conv2d_batchnorm_relu.1} parent=11 // pred_region
        _
      $region24: #{conv2d_batchnorm_relu.1} parent=11 // pred_fallthru
        _
    $region12: #{conv2d_batchnorm_relu.1} parent=5 // pred_fallthru
      _
    %p144 = scmp.lt.s32.totalorder %s10, 4
    // Predicated region
    $region25: #{conv2d_batchnorm_relu.1} parent=5 // pred_check
      %p145 = pneg %p144
    $region26: #{conv2d_batchnorm_relu.1} parent=5 // pred_check_branch
      %147 = sbr.rel (%p145) target = $region28
    $region27: #{conv2d_batchnorm_relu.1} parent=5 // pred_region
      // Predicated region
      $region29: #{conv2d_batchnorm_relu.1} parent=27 // pred_check
        %p148 = pneg %p30
      $region30: #{conv2d_batchnorm_relu.1} parent=27 // pred_check_branch
        %150 = sbr.rel (%p148) target = $region32
      $region31: #{conv2d_batchnorm_relu.1} parent=27 // pred_region
        %s151 = smul.u32 16, %s10
        %p152 = scmp.lt.s32.totalorder %s151, 63
        %s153 = scalar_select %p152, %s151, 63
        %s154 = smul.addr %s153, 4
        %s155 = scalar_lea.vmem %s0, %s154
        %s156 = smul.u32 16, %s10
      $region32: #{conv2d_batchnorm_relu.1} parent=27 // pred_fallthru
        _
    $region28: #{conv2d_batchnorm_relu.1} parent=5 // pred_fallthru
      _
    %p157 = scmp.le.s32.totalorder 1, %s10
    %p158 = scmp.lt.s32.totalorder %s10, 5
    %p159 = pnand %p157, %p158
    %p160 = pneg %p159
    // Predicated region
    $region33: #{conv2d_batchnorm_relu.1} parent=5 // pred_check
      _
    $region34: #{conv2d_batchnorm_relu.1} parent=5 // pred_check_branch
      %162 = sbr.rel (%p159) target = $region36
    $region35: #{conv2d_batchnorm_relu.1} parent=5 // pred_region
      %s163 = ssub.s32 %s10, 1
      %s164 = smul.u32 16, %s15
      %p165 = scmp.lt.s32.totalorder %s164, 63
      %s166 = scalar_select %p165, %s164, 63
      %s167 = smul.addr %s166, 4
      %s168 = scalar_lea.vmem %s0, %s167
      %p169 = pneg %p36
      %p170 = pneg %p33
      %p171 = pneg %p57
      %p172 = pneg %p54
      %p173 = pneg %p78
      %p174 = pneg %p75
      %p175 = pneg %p99
      %p176 = pneg %p96
      %p177 = pneg %p120
      %p178 = pneg %p117
      %s179 = smul.u32 16, %s15
      %p180 = scmp.lt.s32.totalorder %s179, 63
      %s181 = scalar_select %p180, %s179, 63
      %s182 = smul.addr %s181, 4
      %s183 = scalar_lea.vmem %s0, %s182
      %s184 = smul.u32 16, %s15
      %p186 = scmp.eq.s32.totalorder %s15, 0
      // Predicated region
      $region37: #{conv2d_batchnorm_relu.1} parent=35 // pred_check
        %p187 = pneg %p186
      $region38: #{conv2d_batchnorm_relu.1} parent=35 // pred_check_branch
        %189 = sbr.rel (%p187) target = $region40
      $region39: #{conv2d_batchnorm_relu.1} parent=35 // pred_region
        %190 = vst [vmem:[#allocation2] sm:$0x1] 0.0
      $region40: #{conv2d_batchnorm_relu.1} parent=35 // pred_fallthru
        _
      %v191 = vld [vmem:[%s183] sm:$0xf]
      %v192 = vld [vmem:[%s183 + $0x4] sm:$0xf]
      %v193 = vld [vmem:[%s183 + $0x8] sm:$0xf]
      %v194 = vld [vmem:[%s183 + $0xc] sm:$0xf]
      %v195 = vld [vmem:[%s183 + $0x10] sm:$0xf]
      %v196 = vld [vmem:[%s183 + $0x14] sm:$0xf]
      %v197 = vld [vmem:[%s183 + $0x18] sm:$0xf]
      %v198 = vld [vmem:[%s183 + $0x1c] sm:$0xf]
      %v199 = vld [vmem:[%s183 + $0x20] sm:$0xf]
      %v200 = vld [vmem:[%s183 + $0x24] sm:$0xf]
      %v201 = vld [vmem:[%s183 + $0x28] sm:$0xf]
      %v202 = vld [vmem:[%s183 + $0x2c] sm:$0xf]
      %v203 = vld [vmem:[%s183 + $0x30] sm:$0xf]
      %v204 = vld [vmem:[%s183 + $0x34] sm:$0xf]
      %v205 = vld [vmem:[%s183 + $0x38] sm:$0xf]
      %v206 = vld [vmem:[%s183 + $0x3c] sm:$0xf]
      %v207 = vld [vmem:[%s1] sm:$0xf]
      %v208 = vld [vmem:[%s1 + $0x4] sm:$0xf]
      %v209 = vld [vmem:[%s1 + $0x8] sm:$0xf]
      %v210 = vld [vmem:[%s1 + $0xc] sm:$0xf]
      %v211 = vld [vmem:[%s1 + $0x10] sm:$0xf]
      %v212 = vld [vmem:[%s1 + $0x14] sm:$0xf]
      %v213 = vld [vmem:[%s1 + $0x18] sm:$0xf]
      %v214 = vld [vmem:[%s1 + $0x1c] sm:$0xf]
      %v215 = vld [vmem:[%s1 + $0x20] sm:$0xf]
      %v216 = vld [vmem:[%s1 + $0x24] sm:$0xf]
      %v217 = vld [vmem:[%s1 + $0x28] sm:$0xf]
      %v218 = vld [vmem:[%s1 + $0x2c] sm:$0xf]
      %v219 = vld [vmem:[%s1 + $0x30] sm:$0xf]
      %v220 = vld [vmem:[%s1 + $0x34] sm:$0xf]
      %v221 = vld [vmem:[%s1 + $0x38] sm:$0xf]
      %v222 = vld [vmem:[%s1 + $0x3c] sm:$0xf]
      %v239 = vunpack.c.l.b16 %v191
      %v240 = vunpack.c.l.b16 %v192
      %v241 = vunpack.c.l.b16 %v193
      %v242 = vunpack.c.l.b16 %v194
      %v243 = vunpack.c.l.b16 %v195
      %v244 = vunpack.c.l.b16 %v196
      %v245 = vunpack.c.l.b16 %v197
      %v246 = vunpack.c.l.b16 %v198
      %v247 = vunpack.c.l.b16 %v199
      %v248 = vunpack.c.l.b16 %v200
      %v249 = vunpack.c.l.b16 %v201
      %v250 = vunpack.c.l.b16 %v202
      %v251 = vunpack.c.l.b16 %v203
      %v252 = vunpack.c.l.b16 %v204
      %v253 = vunpack.c.l.b16 %v205
      %v254 = vunpack.c.l.b16 %v206
      %v255 = vpack.c.b16 %v240, %v239
      %v256 = vpack.c.b16 %v242, %v241
      %v257 = vpack.c.b16 %v244, %v243
      %v258 = vpack.c.b16 %v246, %v245
      %v259 = vpack.c.b16 %v248, %v247
      %v260 = vpack.c.b16 %v250, %v249
      %v261 = vpack.c.b16 %v252, %v251
      %v262 = vpack.c.b16 %v254, %v253
      %v287 = vunpack.c.l.b16 %v207
      %v288 = vunpack.c.l.b16 %v208
      %v289 = vunpack.c.l.b16 %v209
      %v290 = vunpack.c.l.b16 %v210
      %v291 = vunpack.c.l.b16 %v211
      %v292 = vunpack.c.l.b16 %v212
      %v293 = vunpack.c.l.b16 %v213
      %v294 = vunpack.c.l.b16 %v214
      %v295 = vunpack.c.l.b16 %v215
      %v296 = vunpack.c.l.b16 %v216
      %v297 = vunpack.c.l.b16 %v217
      %v298 = vunpack.c.l.b16 %v218
      %v299 = vunpack.c.l.b16 %v219
      %v300 = vunpack.c.l.b16 %v220
      %v301 = vunpack.c.l.b16 %v221
      %v302 = vunpack.c.l.b16 %v222
      %v303 = vpack.c.b16 %v288, %v287
      %v304 = vpack.c.b16 %v290, %v289
      %v305 = vpack.c.b16 %v292, %v291
      %v306 = vpack.c.b16 %v294, %v293
      %v307 = vpack.c.b16 %v296, %v295
      %v308 = vpack.c.b16 %v298, %v297
      %v309 = vpack.c.b16 %v300, %v299
      %v310 = vpack.c.b16 %v302, %v301
      %319 = vmatprep.subr.bf16.mxu0 0
      %320 = vmatpush1.bf16.msra.mxu0 %v310
      %321 = vmatprep.subr.bf16.mxu0 0
      %322 = vmatpush1.bf16.msra.mxu0 %v309
      %323 = vmatprep.subr.bf16.mxu0 0
      %324 = vmatpush1.bf16.msra.mxu0 %v308
      %325 = vmatprep.subr.bf16.mxu0 0
      %326 = vmatpush1.bf16.msra.mxu0 %v307
      %327 = vmatprep.subr.bf16.mxu0 0
      %328 = vmatpush1.bf16.msra.mxu0 %v306
      %329 = vmatprep.subr.bf16.mxu0 0
      %330 = vmatpush1.bf16.msra.mxu0 %v305
      %331 = vmatprep.subr.bf16.mxu0 0
      %332 = vmatpush1.bf16.msra.mxu0 %v304
      %333 = vmatprep.subr.bf16.mxu0 0
      %334 = vmatpush1.bf16.msra.mxu0 %v303
      %335 = vmatprep.subr.bf16.mxu0 0
      %336 = vmatpush2.bf16.msra.mxu0 0
      %337 = vmatprep.subr.bf16.mxu0 0
      %338 = vmatpush2.bf16.msra.mxu0 0
      %339 = vmatprep.subr.bf16.mxu0 0
      %340 = vmatpush2.bf16.msra.mxu0 0
      %341 = vmatprep.subr.bf16.mxu0 0
      %342 = vmatpush2.bf16.msra.mxu0 0
      %343 = vmatprep.subr.bf16.mxu0 0
      %344 = vmatpush2.bf16.msra.mxu0 0
      %345 = vmatprep.subr.bf16.mxu0 0
      %346 = vmatpush2.bf16.msra.mxu0 0
      %347 = vmatprep.subr.bf16.mxu0 0
      %348 = vmatpush2.bf16.msra.mxu0 0
      %349 = vmatprep.subr.bf16.mxu0 0
      %350 = vmatpush2.bf16.msra.mxu0 0
      %351 = vmatprep.mubr.bf16.mxu0 0
      %352 = vmatmul.mubr.bf16.gmra.mxu0 %v255
      %v353 = vpop.f32.mrf.mxu0
      %v354 = vadd.f32 0.0, %v353
      %v355 = vpop.f32.mrf.mxu0
      %v356 = vpop.f32.mrf.mxu0
      %v357 = vadd.f32 0.0, %v356
      %v358 = vpop.f32.mrf.mxu0
      %359 = vmatprep.mubr.bf16.mxu0 0
      %360 = vmatmul.mubr.bf16.gmra.mxu0 %v256
      %v361 = vpop.f32.mrf.mxu0
      %v362 = vadd.f32 0.0, %v361
      %v363 = vpop.f32.mrf.mxu0
      %v364 = vpop.f32.mrf.mxu0
      %v365 = vadd.f32 0.0, %v364
      %v366 = vpop.f32.mrf.mxu0
      %367 = vmatprep.mubr.bf16.mxu0 0
      %368 = vmatmul.mubr.bf16.gmra.mxu0 %v257
      %v369 = vpop.f32.mrf.mxu0
      %v370 = vadd.f32 0.0, %v369
      %v371 = vpop.f32.mrf.mxu0
      %v372 = vpop.f32.mrf.mxu0
      %v373 = vadd.f32 0.0, %v372
      %v374 = vpop.f32.mrf.mxu0
      %375 = vmatprep.mubr.bf16.mxu0 0
      %376 = vmatmul.mubr.bf16.gmra.mxu0 %v258
      %v377 = vpop.f32.mrf.mxu0
      %v378 = vadd.f32 0.0, %v377
      %v379 = vpop.f32.mrf.mxu0
      %v380 = vpop.f32.mrf.mxu0
      %v381 = vadd.f32 0.0, %v380
      %v382 = vpop.f32.mrf.mxu0
      %383 = vmatprep.mubr.bf16.mxu0 0
      %384 = vmatmul.mubr.bf16.gmra.mxu0 %v259
      %v385 = vpop.f32.mrf.mxu0
      %v386 = vadd.f32 0.0, %v385
      %v387 = vpop.f32.mrf.mxu0
      %v388 = vpop.f32.mrf.mxu0
      %v389 = vadd.f32 0.0, %v388
      %v390 = vpop.f32.mrf.mxu0
      %391 = vmatprep.mubr.bf16.mxu0 0
      %392 = vmatmul.mubr.bf16.gmra.mxu0 %v260
      %v393 = vpop.f32.mrf.mxu0
      %v394 = vadd.f32 0.0, %v393
      %v395 = vpop.f32.mrf.mxu0
      %v396 = vpop.f32.mrf.mxu0
      %v397 = vadd.f32 0.0, %v396
      %v398 = vpop.f32.mrf.mxu0
      %399 = vmatprep.mubr.bf16.mxu0 0
      %400 = vmatmul.mubr.bf16.gmra.mxu0 %v261
      %v401 = vpop.f32.mrf.mxu0
      %v402 = vadd.f32 0.0, %v401
      %v403 = vpop.f32.mrf.mxu0
      %v404 = vpop.f32.mrf.mxu0
      %v405 = vadd.f32 0.0, %v404
      %v406 = vpop.f32.mrf.mxu0
      %407 = vmatprep.mubr.bf16.mxu0 0
      %408 = vmatmul.mubr.bf16.gmra.mxu0 %v262
      %v409 = vpop.f32.mrf.mxu0
      %v410 = vadd.f32 0.0, %v409
      %v411 = vpop.f32.mrf.mxu0
      %v412 = vpop.f32.mrf.mxu0
      %v413 = vadd.f32 0.0, %v412
      %v414 = vpop.f32.mrf.mxu0
      %415 = vdwg.mxu0
      %s416 = smul.u32 %s15, 128
      %s417 = scalar_lea.vmem %s4, %s416
      %418 = vst [vmem:[%s417] sm:$0xff] %v354
      %419 = vst [vmem:[%s417 + $0x8] sm:$0xff] %v357
      %420 = vst [vmem:[%s417 + $0x10] sm:$0xff] %v362
      %421 = vst [vmem:[%s417 + $0x18] sm:$0xff] %v365
      %422 = vst [vmem:[%s417 + $0x20] sm:$0xff] %v370
      %423 = vst [vmem:[%s417 + $0x28] sm:$0xff] %v373
      %424 = vst [vmem:[%s417 + $0x30] sm:$0xff] %v378
      %425 = vst [vmem:[%s417 + $0x38] sm:$0xff] %v381
      %426 = vst [vmem:[%s417 + $0x40] sm:$0xff] %v386
      %427 = vst [vmem:[%s417 + $0x48] sm:$0xff] %v389
      %428 = vst [vmem:[%s417 + $0x50] sm:$0xff] %v394
      %429 = vst [vmem:[%s417 + $0x58] sm:$0xff] %v397
      %430 = vst [vmem:[%s417 + $0x60] sm:$0xff] %v402
      %431 = vst [vmem:[%s417 + $0x68] sm:$0xff] %v405
      %432 = vst [vmem:[%s417 + $0x70] sm:$0xff] %v410
      %433 = vst [vmem:[%s417 + $0x78] sm:$0xff] %v413
      %v434 = vld [vmem:[#allocation2] sm:$0x1]
      %v435 = vadd.f32 %v354, %v357
      %v436 = vadd.f32 %v435, %v362
      %v437 = vadd.f32 %v436, %v365
      %v438 = vadd.f32 %v437, %v370
      %v439 = vadd.f32 %v438, %v373
      %v440 = vadd.f32 %v439, %v378
      %v441 = vadd.f32 %v440, %v381
      %v442 = vadd.f32 %v441, %v386
      %v443 = vadd.f32 %v442, %v389
      %v444 = vadd.f32 %v443, %v394
      %v445 = vadd.f32 %v444, %v397
      %v446 = vadd.f32 %v445, %v402
      %v447 = vadd.f32 %v446, %v405
      %v448 = vadd.f32 %v447, %v410
      %v449 = vadd.f32 %v448, %v413
      %v450 = vrot.slane %v449, 4
      %v451 = vadd.f32 %v449, %v450
      %v452 = vrot.slane %v451, 2
      %v453 = vadd.f32 %v451, %v452
      %v454 = vrot.slane %v453, 1
      %v455 = vadd.f32 %v453, %v454
      %v456 = vadd.f32 %v434, %v455
      %457 = vst [vmem:[#allocation2] sm:$0x1] %v456
      %p458 = scmp.eq.s32.totalorder %s15, 3
      // Predicated region
      $region41: #{conv2d_batchnorm_relu.1} parent=35 // pred_check
        %p459 = pneg %p458
      $region42: #{conv2d_batchnorm_relu.1} parent=35 // pred_check_branch
        %461 = sbr.rel (%p459) target = $region44
      $region43: #{conv2d_batchnorm_relu.1} parent=35 // pred_region
        %v462 = vld [vmem:[#allocation2] sm:$0x1]
        %v463 = vmul.f32 %v462, 0.001953125
        loop: start=0, step=1, limit=4
        $region45: #{conv2d_batchnorm_relu.1} parent=43 // loop_pre_header
          _
        $region46: #{conv2d_batchnorm_relu.1} parent=43 // loop_header
          %s465 = sphi 0, %s469
          %p466 = scmp.ge.s32.totalorder %s465, 4
          %v470 = vphi 0.0, %v548
        $region47: #{conv2d_batchnorm_relu.1} parent=43 // loop_header_branch
          %468 = sbr.rel (%p466) target = $region51
        $region48: #{conv2d_batchnorm_relu.1} parent=43 // loop_body
          %s471 = smul.u32 %s465, 128
          %s472 = scalar_lea.vmem %s4, %s471
          %v473 = vld [vmem:[%s472] sm:$0xff]
          %v474 = vld [vmem:[%s472 + $0x8] sm:$0xff]
          %v475 = vld [vmem:[%s472 + $0x10] sm:$0xff]
          %v476 = vld [vmem:[%s472 + $0x18] sm:$0xff]
          %v477 = vld [vmem:[%s472 + $0x20] sm:$0xff]
          %v478 = vld [vmem:[%s472 + $0x28] sm:$0xff]
          %v479 = vld [vmem:[%s472 + $0x30] sm:$0xff]
          %v480 = vld [vmem:[%s472 + $0x38] sm:$0xff]
          %v481 = vld [vmem:[%s472 + $0x40] sm:$0xff]
          %v482 = vld [vmem:[%s472 + $0x48] sm:$0xff]
          %v483 = vld [vmem:[%s472 + $0x50] sm:$0xff]
          %v484 = vld [vmem:[%s472 + $0x58] sm:$0xff]
          %v485 = vld [vmem:[%s472 + $0x60] sm:$0xff]
          %v486 = vld [vmem:[%s472 + $0x68] sm:$0xff]
          %v487 = vld [vmem:[%s472 + $0x70] sm:$0xff]
          %v488 = vld [vmem:[%s472 + $0x78] sm:$0xff]
          %v490 = vlaneseq
          %v491 = vshrl.u32 %v490, 7
          %v492 = vsub.s32 0, %v491
          %v493 = vrot.slane %v463, %v492
          %v495 = vsub.f32 %v473, %v493
          %v496 = vsub.f32 %v474, %v493
          %v497 = vsub.f32 %v475, %v493
          %v498 = vsub.f32 %v476, %v493
          %v499 = vsub.f32 %v477, %v493
          %v500 = vsub.f32 %v478, %v493
          %v501 = vsub.f32 %v479, %v493
          %v502 = vsub.f32 %v480, %v493
          %v503 = vsub.f32 %v481, %v493
          %v504 = vsub.f32 %v482, %v493
          %v505 = vsub.f32 %v483, %v493
          %v506 = vsub.f32 %v484, %v493
          %v507 = vsub.f32 %v485, %v493
          %v508 = vsub.f32 %v486, %v493
          %v509 = vsub.f32 %v487, %v493
          %v510 = vsub.f32 %v488, %v493
          %v511 = vmul.f32 %v495, %v495
          %v512 = vmul.f32 %v496, %v496
          %v513 = vmul.f32 %v497, %v497
          %v514 = vmul.f32 %v498, %v498
          %v515 = vmul.f32 %v499, %v499
          %v516 = vmul.f32 %v500, %v500
          %v517 = vmul.f32 %v501, %v501
          %v518 = vmul.f32 %v502, %v502
          %v519 = vmul.f32 %v503, %v503
          %v520 = vmul.f32 %v504, %v504
          %v521 = vmul.f32 %v505, %v505
          %v522 = vmul.f32 %v506, %v506
          %v523 = vmul.f32 %v507, %v507
          %v524 = vmul.f32 %v508, %v508
          %v525 = vmul.f32 %v509, %v509
          %v526 = vmul.f32 %v510, %v510
          %v527 = vadd.f32 %v511, %v512
          %v528 = vadd.f32 %v527, %v513
          %v529 = vadd.f32 %v528, %v514
          %v530 = vadd.f32 %v529, %v515
          %v531 = vadd.f32 %v530, %v516
          %v532 = vadd.f32 %v531, %v517
          %v533 = vadd.f32 %v532, %v518
          %v534 = vadd.f32 %v533, %v519
          %v535 = vadd.f32 %v534, %v520
          %v536 = vadd.f32 %v535, %v521
          %v537 = vadd.f32 %v536, %v522
          %v538 = vadd.f32 %v537, %v523
          %v539 = vadd.f32 %v538, %v524
          %v540 = vadd.f32 %v539, %v525
          %v541 = vadd.f32 %v540, %v526
          %v542 = vrot.slane %v541, 4
          %v543 = vadd.f32 %v541, %v542
          %v544 = vrot.slane %v543, 2
          %v545 = vadd.f32 %v543, %v544
          %v546 = vrot.slane %v545, 1
          %v547 = vadd.f32 %v545, %v546
          %v548 = vadd.f32 %v470, %v547
        $region49: #{conv2d_batchnorm_relu.1} parent=43 // loop_footer
          %s469 = sadd.s32 1, %s465
        $region50: #{conv2d_batchnorm_relu.1} parent=43 // loop_footer_branch
          %464 = sbr.rel target = $region46
        $region51: #{conv2d_batchnorm_relu.1} parent=43 // loop_exit
          _
        %v549 = vmul.f32 %v463, 0.0
        %v550 = vmul.f32 %v549, %v463
        %v551 = vsub.f32 %v470, %v550
        %v552 = vmul.f32 %v551, 0.001953125
        %v553 = vmax.f32 %v552, 0.0
        %v554 = vadd.f32 %v553, 1e-05
        %v555 = vrsqrt.pop %v554
        %v556 = vld [vmem:[%s2] sm:$0x1]
        %v557 = vmul.f32 %v556, %v555
        %v558 = vld [vmem:[%s3] sm:$0x1]
        %v559 = vmul.f32 %v463, %v557
        %v560 = vsub.f32 %v558, %v559
        loop: start=0, step=1, limit=4
        $region52: #{conv2d_batchnorm_relu.1} parent=43 // loop_pre_header
          _
        $region53: #{conv2d_batchnorm_relu.1} parent=43 // loop_header
          %s562 = sphi 0, %s566
          %p563 = scmp.ge.s32.totalorder %s562, 4
        $region54: #{conv2d_batchnorm_relu.1} parent=43 // loop_header_branch
          %565 = sbr.rel (%p563) target = $region58
        $region55: #{conv2d_batchnorm_relu.1} parent=43 // loop_body
          %s567 = smul.u32 %s562, 128
          %s568 = scalar_lea.vmem %s4, %s567
          %v569 = vld [vmem:[%s568] sm:$0xff]
          %v570 = vld [vmem:[%s568 + $0x8] sm:$0xff]
          %v571 = vld [vmem:[%s568 + $0x10] sm:$0xff]
          %v572 = vld [vmem:[%s568 + $0x18] sm:$0xff]
          %v573 = vld [vmem:[%s568 + $0x20] sm:$0xff]
          %v574 = vld [vmem:[%s568 + $0x28] sm:$0xff]
          %v575 = vld [vmem:[%s568 + $0x30] sm:$0xff]
          %v576 = vld [vmem:[%s568 + $0x38] sm:$0xff]
          %v577 = vld [vmem:[%s568 + $0x40] sm:$0xff]
          %v578 = vld [vmem:[%s568 + $0x48] sm:$0xff]
          %v579 = vld [vmem:[%s568 + $0x50] sm:$0xff]
          %v580 = vld [vmem:[%s568 + $0x58] sm:$0xff]
          %v581 = vld [vmem:[%s568 + $0x60] sm:$0xff]
          %v582 = vld [vmem:[%s568 + $0x68] sm:$0xff]
          %v583 = vld [vmem:[%s568 + $0x70] sm:$0xff]
          %v584 = vld [vmem:[%s568 + $0x78] sm:$0xff]
          %v586 = vlaneseq
          %v587 = vshrl.u32 %v586, 7
          %v588 = vsub.s32 0, %v587
          %v589 = vrot.slane %v557, %v588
          %v591 = vmul.f32 %v569, %v589
          %v592 = vmul.f32 %v570, %v589
          %v593 = vmul.f32 %v571, %v589
          %v594 = vmul.f32 %v572, %v589
          %v595 = vmul.f32 %v573, %v589
          %v596 = vmul.f32 %v574, %v589
          %v597 = vmul.f32 %v575, %v589
          %v598 = vmul.f32 %v576, %v589
          %v599 = vmul.f32 %v577, %v589
          %v600 = vmul.f32 %v578, %v589
          %v601 = vmul.f32 %v579, %v589
          %v602 = vmul.f32 %v580, %v589
          %v603 = vmul.f32 %v581, %v589
          %v604 = vmul.f32 %v582, %v589
          %v605 = vmul.f32 %v583, %v589
          %v606 = vmul.f32 %v584, %v589
          %v608 = vlaneseq
          %v609 = vshrl.u32 %v608, 7
          %v610 = vsub.s32 0, %v609
          %v611 = vrot.slane %v560, %v610
          %v613 = vadd.f32 %v591, %v611
          %v614 = vadd.f32 %v592, %v611
          %v615 = vadd.f32 %v593, %v611
          %v616 = vadd.f32 %v594, %v611
          %v617 = vadd.f32 %v595, %v611
          %v618 = vadd.f32 %v596, %v611
          %v619 = vadd.f32 %v597, %v611
          %v620 = vadd.f32 %v598, %v611
          %v621 = vadd.f32 %v599, %v611
          %v622 = vadd.f32 %v600, %v611
          %v623 = vadd.f32 %v601, %v611
          %v624 = vadd.f32 %v602, %v611
          %v625 = vadd.f32 %v603, %v611
          %v626 = vadd.f32 %v604, %v611
          %v627 = vadd.f32 %v605, %v611
          %v628 = vadd.f32 %v606, %v611
          %v629 = vmax.f32 %v613, 0.0
          %v630 = vmax.f32 %v614, 0.0
          %v631 = vmax.f32 %v615, 0.0
          %v632 = vmax.f32 %v616, 0.0
          %v633 = vmax.f32 %v617, 0.0
          %v634 = vmax.f32 %v618, 0.0
          %v635 = vmax.f32 %v619, 0.0
          %v636 = vmax.f32 %v620, 0.0
          %v637 = vmax.f32 %v621, 0.0
          %v638 = vmax.f32 %v622, 0.0
          %v639 = vmax.f32 %v623, 0.0
          %v640 = vmax.f32 %v624, 0.0
          %v641 = vmax.f32 %v625, 0.0
          %v642 = vmax.f32 %v626, 0.0
          %v643 = vmax.f32 %v627, 0.0
          %v644 = vmax.f32 %v628, 0.0
          %645 = vst [vmem:[%s568] sm:$0xff] %v629
          %646 = vst [vmem:[%s568 + $0x8] sm:$0xff] %v630
          %647 = vst [vmem:[%s568 + $0x10] sm:$0xff] %v631
          %648 = vst [vmem:[%s568 + $0x18] sm:$0xff] %v632
          %649 = vst [vmem:[%s568 + $0x20] sm:$0xff] %v633
          %650 = vst [vmem:[%s568 + $0x28] sm:$0xff] %v634
          %651 = vst [vmem:[%s568 + $0x30] sm:$0xff] %v635
          %652 = vst [vmem:[%s568 + $0x38] sm:$0xff] %v636
          %653 = vst [vmem:[%s568 + $0x40] sm:$0xff] %v637
          %654 = vst [vmem:[%s568 + $0x48] sm:$0xff] %v638
          %655 = vst [vmem:[%s568 + $0x50] sm:$0xff] %v639
          %656 = vst [vmem:[%s568 + $0x58] sm:$0xff] %v640
          %657 = vst [vmem:[%s568 + $0x60] sm:$0xff] %v641
          %658 = vst [vmem:[%s568 + $0x68] sm:$0xff] %v642
          %659 = vst [vmem:[%s568 + $0x70] sm:$0xff] %v643
          %660 = vst [vmem:[%s568 + $0x78] sm:$0xff] %v644
        $region56: #{conv2d_batchnorm_relu.1} parent=43 // loop_footer
          %s566 = sadd.s32 1, %s562
        $region57: #{conv2d_batchnorm_relu.1} parent=43 // loop_footer_branch
          %561 = sbr.rel target = $region53
        $region58: #{conv2d_batchnorm_relu.1} parent=43 // loop_exit
          _
      $region44: #{conv2d_batchnorm_relu.1} parent=35 // pred_fallthru
        _
      // Predicated region
      $region59: #{conv2d_batchnorm_relu.1} parent=35 // pred_check
        %p661 = pneg %p117
      $region60: #{conv2d_batchnorm_relu.1} parent=35 // pred_check_branch
        %663 = sbr.rel (%p661) target = $region62
      $region61: #{conv2d_batchnorm_relu.1} parent=35 // pred_region
        _
      $region62: #{conv2d_batchnorm_relu.1} parent=35 // pred_fallthru
        _
      // Predicated region
      $region63: #{conv2d_batchnorm_relu.1} parent=35 // pred_check
        %p664 = pneg %p117
      $region64: #{conv2d_batchnorm_relu.1} parent=35 // pred_check_branch
        %666 = sbr.rel (%p664) target = $region66
      $region65: #{conv2d_batchnorm_relu.1} parent=35 // pred_region
        _
      $region66: #{conv2d_batchnorm_relu.1} parent=35 // pred_fallthru
        _
    $region36: #{conv2d_batchnorm_relu.1} parent=5 // pred_fallthru
      _
    %p667 = scmp.le.s32.totalorder 2, %s10
    // Predicated region
    $region67: #{conv2d_batchnorm_relu.1} parent=5 // pred_check
      %p668 = pneg %p667
    $region68: #{conv2d_batchnorm_relu.1} parent=5 // pred_check_branch
      %670 = sbr.rel (%p668) target = $region70
    $region69: #{conv2d_batchnorm_relu.1} parent=5 // pred_region
      %s671 = ssub.s32 %s10, 2
    $region70: #{conv2d_batchnorm_relu.1} parent=5 // pred_fallthru
      _
  $region6: #{conv2d_batchnorm_relu.1} parent=0 // loop_footer
    %s14 = sadd.s32 1, %s10
  $region7: #{conv2d_batchnorm_relu.1} parent=0 // loop_footer_branch
    %9 = sbr.rel target = $region3
  $region8: #{conv2d_batchnorm_relu.1} parent=0 // loop_exit
    _

</llo_original>
